<compile_context>
chip_gen: v7x
topology: tpu7x:2x2x1
jax: 0.10.0
libtpu: 0.0.40
codegen_flags: <defaults>
</compile_context>

<pallas_src>
import jax
import jax.numpy as jnp
import numpy as np
from jax.experimental import pallas as pl
from jax.experimental.pallas import tpu as pltpu

_FLAT_MAX_HW = 1024            # flattened-DFT path when H*W <= this
_VMEM_LIMIT = 48 * 1024 * 1024  # fits v5e/v6e (128 MiB) and v7x (64 MiB)


def _round_up(x: int, m: int) -> int:
    return (x + m - 1) // m * m


# ---------------------------------------------------------------------------
# Kernels
# ---------------------------------------------------------------------------
def _fft_flat_kernel(x1_ref, x2_ref, op_ref, out_ref):
    """Flattened-DFT path: accumulate |FFT2(x1 - x2)| for one batch tile.

    x1_ref / x2_ref : (TB, H*W)    flattened image tiles
    op_ref          : (H*W, 2*H*W) real DFT operator [Re | Im]
    out_ref         : (TB, 2*H*W)  per-core elementwise accumulator (same
                      block across the "arbitrary" axis; summed in wrapper)
    """
    b = pl.program_id(1)

    @pl.when(b == 0)
    def _():
        out_ref[...] = jnp.zeros_like(out_ref)

    d = x1_ref[...].astype(jnp.float32) - x2_ref[...].astype(jnp.float32)
    y = jnp.dot(d, op_ref[...], preferred_element_type=jnp.float32)
    out_ref[...] += jnp.abs(y)


def _fft_sep_kernel(x1_ref, x2_ref, ch_ref, sh_ref, cw_ref, sw_ref, out_ref):
    """Separable path (large H, W): Y = F_H @ (x1 - x2) @ F_W, one image/step.

    out_ref : (H, W) elementwise accumulator of |Re| + |Im| (summed in wrapper).
    """
    b = pl.program_id(0)

    @pl.when(b == 0)
    def _():
        out_ref[...] = jnp.zeros_like(out_ref)

    d = x1_ref[0].astype(jnp.float32) - x2_ref[0].astype(jnp.float32)
    ar = jnp.dot(ch_ref[...], d, preferred_element_type=jnp.float32)
    ai = jnp.dot(sh_ref[...], d, preferred_element_type=jnp.float32)
    yr = (jnp.dot(ar, cw_ref[...], preferred_element_type=jnp.float32)
          - jnp.dot(ai, sw_ref[...], preferred_element_type=jnp.float32))
    yi = (jnp.dot(ar, sw_ref[...], preferred_element_type=jnp.float32)
          + jnp.dot(ai, cw_ref[...], preferred_element_type=jnp.float32))
    out_ref[...] += jnp.abs(yr) + jnp.abs(yi)


# ---------------------------------------------------------------------------
# DFT operator construction (host-side, trace-time constants)
# ---------------------------------------------------------------------------
def _flat_dft_operator(h: int, w: int) -> jax.Array:
    """(H*W, 2*H*W) real operator so that x_flat @ op = [Re(Y) | Im(Y)]."""
    hh = np.arange(h)
    ww = np.arange(w)
    ph = np.outer(hh, hh) / float(h)                     # [h, u] = h*u/H
    pw = np.outer(ww, ww) / float(w)                     # [w, v] = w*v/W
    phase = ph[:, None, :, None] + pw[None, :, None, :]  # [(h,w),(u,v)]
    ang = 2.0 * np.pi * phase.reshape(h * w, h * w)
    re = np.cos(ang)
    im = -np.sin(ang)
    return jnp.asarray(np.concatenate([re, im], axis=1), dtype=jnp.float32)


def _dft_matrices(n: int):
    """Real (cos) and imaginary (-sin) parts of the n-point DFT matrix."""
    k = np.arange(n)
    ang = 2.0 * np.pi * np.outer(k, k) / float(n)
    return (jnp.asarray(np.cos(ang), dtype=jnp.float32),
            jnp.asarray(-np.sin(ang), dtype=jnp.float32))


# ---------------------------------------------------------------------------
# Wrappers
# ---------------------------------------------------------------------------
def _fft_loss_flat(x1, x2, h, w):
    bsz = x1.shape[0]
    hw = h * w
    x1f = x1.reshape(bsz, hw)
    x2f = x2.reshape(bsz, hw)

    tb = min(128, _round_up(bsz, 8))          # batch tile (sublane-aligned)
    nb_total = pl.cdiv(bsz, tb)
    split = 2 if nb_total >= 2 else 1         # v7x: one output block per core
    nb_per_core = pl.cdiv(nb_total, split)
    b_pad = split * nb_per_core * tb
    if b_pad != bsz:                          # zero padding -> zero diff -> 0
        x1f = jnp.pad(x1f, ((0, b_pad - bsz), (0, 0)))
        x2f = jnp.pad(x2f, ((0, b_pad - bsz), (0, 0)))

    op = _flat_dft_operator(h, w)

    x_spec = pl.BlockSpec((tb, hw), lambda c, b: (c * nb_per_core + b, 0))
    op_spec = pl.BlockSpec((hw, 2 * hw), lambda c, b: (0, 0))
    out_spec = pl.BlockSpec((tb, 2 * hw), lambda c, b: (c, 0))

    partial = pl.pallas_call(
        _fft_flat_kernel,
        out_shape=jax.ShapeDtypeStruct((split * tb, 2 * hw), jnp.float32),
        grid=(split, nb_per_core),
        in_specs=[x_spec, x_spec, op_spec],
        out_specs=out_spec,
        compiler_params=pltpu.CompilerParams(
            dimension_semantics=("parallel", "arbitrary"),
            vmem_limit_bytes=_VMEM_LIMIT),
    )(x1f, x2f, op)
    return jnp.sum(partial)


def _fft_loss_sep(x1, x2, h, w):
    bsz = x1.shape[0]
    ch, sh = _dft_matrices(h)
    if h == w:
        cw, sw = ch, sh        # DFT matrix is symmetric; reuse (halves VMEM)
    else:
        cw, sw = _dft_matrices(w)

    img_spec = pl.BlockSpec((1, h, w), lambda b: (b, 0, 0))
    mh_spec = pl.BlockSpec((h, h), lambda b: (0, 0))
    mw_spec = pl.BlockSpec((w, w), lambda b: (0, 0))

    partial = pl.pallas_call(
        _fft_sep_kernel,
        out_shape=jax.ShapeDtypeStruct((h, w), jnp.float32),
        grid=(bsz,),
        in_specs=[img_spec, img_spec, mh_spec, mh_spec, mw_spec, mw_spec],
        out_specs=pl.BlockSpec((h, w), lambda b: (0, 0)),
        compiler_params=pltpu.CompilerParams(
            dimension_semantics=("arbitrary",),
            vmem_limit_bytes=_VMEM_LIMIT),
    )(x1, x2, ch, sh, cw, sw)
    return jnp.sum(partial)


@jax.jit
def fft_loss(img1: jax.Array, img2: jax.Array) -> jax.Array:
    """Pallas implementation of FFTloss(loss_f=nn.L1Loss, reduction='mean')."""
    assert img1.shape == img2.shape
    n, c, h, w = img1.shape
    bsz = n * c
    x1 = img1.reshape(bsz, h, w)
    x2 = img2.reshape(bsz, h, w)

    if h * w <= _FLAT_MAX_HW:
        total = _fft_loss_flat(x1, x2, h, w)
    else:
        total = _fft_loss_sep(x1, x2, h, w)

    # L1Loss 'mean' divides by the element count of the stacked tensor,
    # which includes the trailing real/imag axis of size 2.
    return total / jnp.float32(n * c * h * w * 2)


def _reference_fft_loss(img1, img2):
    """Pure-JAX reference matching the PyTorch forward."""
    f1 = jnp.fft.fft2(img1.astype(jnp.float32), axes=(-2, -1))
    f2 = jnp.fft.fft2(img2.astype(jnp.float32), axes=(-2, -1))
    d = f1 - f2
    stacked = jnp.stack([jnp.real(d), jnp.imag(d)], axis=-1)
    return jnp.mean(jnp.abs(stacked))


if __name__ == "__main__":
    key = jax.random.PRNGKey(0)
    k1, k2, k3, k4 = jax.random.split(key, 4)

    # Small NCHW case (flattened-DFT path).
    N, C, H, W = 2, 4, 16, 16
    img1 = jax.random.normal(k1, (N, C, H, W), dtype=jnp.float32)
    img2 = jax.random.normal(k2, (N, C, H, W), dtype=jnp.float32)
    loss = fft_loss(img1, img2)
    jax.block_until_ready(loss)
    ref = _reference_fft_loss(img1, img2)
    np.testing.assert_allclose(np.asarray(loss), np.asarray(ref),
                               rtol=2e-3, atol=1e-3)

    # Larger spatial case exercising the separable fallback path.
    N2, C2, H2, W2 = 1, 2, 40, 40
    a1 = jax.random.normal(k3, (N2, C2, H2, W2), dtype=jnp.float32)
    a2 = jax.random.normal(k4, (N2, C2, H2, W2), dtype=jnp.float32)
    loss2 = fft_loss(a1, a2)
    jax.block_until_ready(loss2)
    ref2 = _reference_fft_loss(a1, a2)
    np.testing.assert_allclose(np.asarray(loss2), np.asarray(ref2),
                               rtol=2e-3, atol=1e-3)

    print("KERNEL_OK")
</pallas_src>

<mosaic_0001>
module attributes {stable_mosaic.version = 11 : i64} {
  func.func @_fft_flat_kernel(%arg0: i32, %arg1: i32, %arg2: memref<8x256xf32, #tpu.memory_space<vmem>>, %arg3: memref<8x256xf32, #tpu.memory_space<vmem>>, %arg4: memref<256x512xf32, #tpu.memory_space<vmem>>, %arg5: memref<8x512xf32, #tpu.memory_space<vmem>>) attributes {dimension_semantics = [#tpu.dimension_semantics<parallel>, #tpu.dimension_semantics<arbitrary>], iteration_bounds = array<i64: 1, 1>, scalar_prefetch = 0 : i64, scratch_operands = 0 : i64, tpu.core_type = #tpu.core_type<tc>, window_params = [{transform_indices = @transform_0, window_bounds = array<i64: 8, 256>}, {transform_indices = @transform_1, window_bounds = array<i64: 8, 256>}, {pipeline_mode = #tpu.pipeline_mode<synchronous>, transform_indices = @transform_2, window_bounds = array<i64: 256, 512>}, {transform_indices = @transform_3, window_bounds = array<i64: 8, 512>}]} {
    %c0_i32 = arith.constant 0 : i32
    %0 = arith.cmpi eq, %arg1, %c0_i32 : i32
    %1 = arith.extui %0 : i1 to i32
    %c0_i32_0 = arith.constant 0 : i32
    %2 = arith.cmpi ne, %1, %c0_i32_0 : i32
    scf.if %2 {
      %cst_10 = arith.constant 0.000000e+00 : f32
      %12 = vector.broadcast %cst_10 : f32 to vector<8x512xf32>
      %c0_11 = arith.constant 0 : index
      %c0_12 = arith.constant 0 : index
      %13 = vector.load %arg5[%c0_11, %c0_12] : memref<8x512xf32, #tpu.memory_space<vmem>>, vector<8x512xf32>
      tpu.vector_store %arg5[%c0_11, %c0_12], %12 {strides = array<i32>} : memref<8x512xf32, #tpu.memory_space<vmem>>, vector<8x512xf32>,
    } else {
    }
    %c0 = arith.constant 0 : index
    %c0_1 = arith.constant 0 : index
    %3 = vector.load %arg2[%c0, %c0_1] : memref<8x256xf32, #tpu.memory_space<vmem>>, vector<8x256xf32>
    %c0_2 = arith.constant 0 : index
    %c0_3 = arith.constant 0 : index
    %4 = vector.load %arg3[%c0_2, %c0_3] : memref<8x256xf32, #tpu.memory_space<vmem>>, vector<8x256xf32>
    %5 = arith.subf %3, %4 : vector<8x256xf32>
    %c0_4 = arith.constant 0 : index
    %c0_5 = arith.constant 0 : index
    %6 = vector.load %arg4[%c0_4, %c0_5] : memref<256x512xf32, #tpu.memory_space<vmem>>, vector<256x512xf32>
    %cst = arith.constant dense<0.000000e+00> : vector<8x512xf32>
    %7 = tpu.matmul %5, %6, %cst {dimension_numbers = #tpu.dot_dimension_numbers<[1], [0], [0], [1], [0, 0, 1, 1], [], []>} : vector<8x256xf32>, vector<256x512xf32>, vector<8x512xf32> -> vector<8x512xf32>
    %c0_6 = arith.constant 0 : index
    %c0_7 = arith.constant 0 : index
    %8 = vector.load %arg5[%c0_6, %c0_7] : memref<8x512xf32, #tpu.memory_space<vmem>>, vector<8x512xf32>
    %9 = math.absf %7 : vector<8x512xf32>
    %10 = arith.addf %8, %9 : vector<8x512xf32>
    %c0_8 = arith.constant 0 : index
    %c0_9 = arith.constant 0 : index
    %11 = vector.load %arg5[%c0_8, %c0_9] : memref<8x512xf32, #tpu.memory_space<vmem>>, vector<8x512xf32>
    tpu.vector_store %arg5[%c0_8, %c0_9], %10 {strides = array<i32>} : memref<8x512xf32, #tpu.memory_space<vmem>>, vector<8x512xf32>,
    return
  }
  func.func @transform_0(%arg0: i32, %arg1: i32) -> (i32, i32) {
    %c1_i32 = arith.constant 1 : i32
    %0 = arith.muli %arg0, %c1_i32 : i32
    %1 = arith.addi %0, %arg1 : i32
    %c0_i32 = arith.constant 0 : i32
    %c0_i32_0 = arith.constant 0 : i32
    return %1, %c0_i32 : i32, i32
  }
  func.func @transform_1(%arg0: i32, %arg1: i32) -> (i32, i32) {
    %c1_i32 = arith.constant 1 : i32
    %0 = arith.muli %arg0, %c1_i32 : i32
    %1 = arith.addi %0, %arg1 : i32
    %c0_i32 = arith.constant 0 : i32
    %c0_i32_0 = arith.constant 0 : i32
    return %1, %c0_i32 : i32, i32
  }
  func.func @transform_2(%arg0: i32, %arg1: i32) -> (i32, i32) {
    %c0_i32 = arith.constant 0 : i32
    %c0_i32_0 = arith.constant 0 : i32
    %c0_i32_1 = arith.constant 0 : i32
    return %c0_i32, %c0_i32_0 : i32, i32
  }
  func.func @transform_3(%arg0: i32, %arg1: i32) -> (i32, i32) {
    %c0_i32 = arith.constant 0 : i32
    %c0_i32_0 = arith.constant 0 : i32
    return %arg0, %c0_i32 : i32, i32
  }
}

</mosaic_0001>

<llo_original>
// kernel: fft_loss.1
$region0: #{fft_loss.1}
  #allocation0 [shape = 'u32[]', space=smem, size = 0x4, offset = 0x4, fixed_abs, tag = 'smem constant byte address 0x4 - core index']
  #allocation1 [shape = 'u32[144,128]{1,0:T(1,128)}', space=vmem, size = 0x12000, scoped, tag = 'internal scratch']
  %s0 = inlined_call_operand.vmem [shape: f32[8,256], index: 0, kind: input, shape index: {}]
  %s1 = inlined_call_operand.vmem [shape: f32[8,256], index: 1, kind: input, shape index: {}]
  %s2 = inlined_call_operand.hbm [shape: f32[256,512], index: 2, kind: input, shape index: {}]
  %s3 = inlined_call_operand.vmem [shape: f32[8,512], index: 3, kind: output, shape index: {}]
  %s4 = sld [smem:[#allocation0]]
  $region30: #{fft_loss.1} parent=0
    _
  %s6 = ssub.s32 1, %s4
  %s7 = scalar_select 0, %s6, %s4
  $region1: #{fft_loss.1} parent=0
    #allocation2 [shape = 'u8[524288]{0}', space=vmem, size = 0x80000, scoped, tag = 'input window, operand 2, single buffered']
    #allocation3 [shape = 's32[1]{0}', space=sflag, size = 0x4, scoped, tag = 'scoped memory for fft_loss.1']
    %8 = vsyncpa [#allocation3], 0
    // Predicated region
    $region2: #{fft_loss.1} parent=1 // pred_check
      _
    $region3: #{fft_loss.1} parent=1 // pred_check_branch
      %10 = sbr.rel (0) target = $region5
    $region4: #{fft_loss.1} parent=1 // pred_region
      %s11 = sadd.s32 0, 0
      %p12 = scmp.lt.s32.totalorder %s11, 0
      %s13 = scalar_select %p12, %s11, 0
      %s14 = smul.addr %s13, 2
      %s15 = smul.addr %s14, 8
      %s16 = scalar_lea.vmem %s0, %s15
      %s17 = sadd.s32 0, 0
    $region5: #{fft_loss.1} parent=1 // pred_fallthru
      _
    // Predicated region
    $region6: #{fft_loss.1} parent=1 // pred_check
      _
    $region7: #{fft_loss.1} parent=1 // pred_check_branch
      %19 = sbr.rel (0) target = $region9
    $region8: #{fft_loss.1} parent=1 // pred_region
      %s20 = sadd.s32 0, 0
      %p21 = scmp.lt.s32.totalorder %s20, 0
      %s22 = scalar_select %p21, %s20, 0
      %s23 = smul.addr %s22, 2
      %s24 = smul.addr %s23, 8
      %s25 = scalar_lea.vmem %s1, %s24
      %s26 = sadd.s32 0, 0
    $region9: #{fft_loss.1} parent=1 // pred_fallthru
      _
    // Predicated region
    $region10: #{fft_loss.1} parent=1 // pred_check
      _
    $region11: #{fft_loss.1} parent=1 // pred_check_branch
      %28 = sbr.rel (0) target = $region13
    $region12: #{fft_loss.1} parent=1 // pred_region
      %s30 = ssub.s32 16384, 16384
      %31 = vsyncadd [#allocation3], %s30
      %s32 = sshll.u32 [#allocation2], 4
      %s33 = int_to_ptr.vmem [resolvable:$true] %s32
      %38 = dma.hbm_to_vmem [thread:$0]  %s2, 16384, %s33, [#allocation3], 512, 512, 32
    $region13: #{fft_loss.1} parent=1 // pred_fallthru
      _
    // Predicated region
    $region14: #{fft_loss.1} parent=1 // pred_check
      _
    $region15: #{fft_loss.1} parent=1 // pred_check_branch
      %40 = sbr.rel (0) target = $region17
    $region16: #{fft_loss.1} parent=1 // pred_region
      %41 = dma.done [#allocation3], 16384
    $region17: #{fft_loss.1} parent=1 // pred_fallthru
      _
    %s42 = sadd.s32 0, 0
    %p43 = scmp.lt.s32.totalorder %s42, 0
    %s44 = scalar_select %p43, %s42, 0
    %s45 = smul.addr %s44, 2
    %s46 = smul.addr %s45, 8
    %s47 = scalar_lea.vmem %s0, %s46
    %s48 = sadd.s32 0, 0
    %p49 = scmp.lt.s32.totalorder %s48, 0
    %s50 = scalar_select %p49, %s48, 0
    %s51 = smul.addr %s50, 2
    %s52 = smul.addr %s51, 8
    %s53 = scalar_lea.vmem %s1, %s52
    %s54 = sadd.s32 0, 0
    %p55 = scmp.lt.s32.totalorder %s54, 0
    %s56 = scalar_select %p55, %s54, 0
    %s57 = smul.addr %s56, 2
    %s58 = smul.addr %s57, 8
    %s59 = scalar_lea.vmem %s0, %s58
    %s60 = sadd.s32 0, 0
    %s61 = sadd.s32 0, 0
    %p62 = scmp.lt.s32.totalorder %s61, 0
    %s63 = scalar_select %p62, %s61, 0
    %s64 = smul.addr %s63, 2
    %s65 = smul.addr %s64, 8
    %s66 = scalar_lea.vmem %s1, %s65
    %s67 = sadd.s32 0, 0
    %p68 = scmp.eq.s32.totalorder 0, 0
    // Predicated region
    $region18: #{fft_loss.1} parent=1 // pred_check
      %p69 = pneg %p68
    $region19: #{fft_loss.1} parent=1 // pred_check_branch
      %71 = sbr.rel (%p69) target = $region21
    $region20: #{fft_loss.1} parent=1 // pred_region
      %72 = vst [vmem:[%s3] sm:$0xff] 0.0
      %73 = vst [vmem:[%s3 + $0x8] sm:$0xff] 0.0
      %74 = vst [vmem:[%s3 + $0x10] sm:$0xff] 0.0
      %75 = vst [vmem:[%s3 + $0x18] sm:$0xff] 0.0
    $region21: #{fft_loss.1} parent=1 // pred_fallthru
      _
    %v76 = vld [vmem:[%s59] sm:$0xff]
    %v77 = vld [vmem:[%s59 + $0x8] sm:$0xff]
    %v78 = vld [vmem:[%s66] sm:$0xff]
    %v79 = vld [vmem:[%s66 + $0x8] sm:$0xff]
    %v80 = vsub.f32 %v76, %v78
    %v81 = vsub.f32 %v77, %v79
    %v82 = vld [vmem:[#allocation2] sm:$0xff]
    %v83 = vld [vmem:[#allocation2 + $0x8] sm:$0xff]
    %v84 = vld [vmem:[#allocation2 + $0x10] sm:$0xff]
    %v85 = vld [vmem:[#allocation2 + $0x18] sm:$0xff]
    %v86 = vld [vmem:[#allocation2 + $0x20] sm:$0xff]
    %v87 = vld [vmem:[#allocation2 + $0x28] sm:$0xff]
    %v88 = vld [vmem:[#allocation2 + $0x30] sm:$0xff]
    %v89 = vld [vmem:[#allocation2 + $0x38] sm:$0xff]
    %v90 = vld [vmem:[#allocation2 + $0x40] sm:$0xff]
    %v91 = vld [vmem:[#allocation2 + $0x48] sm:$0xff]
    %v92 = vld [vmem:[#allocation2 + $0x50] sm:$0xff]
    %v93 = vld [vmem:[#allocation2 + $0x58] sm:$0xff]
    %v94 = vld [vmem:[#allocation2 + $0x60] sm:$0xff]
    %v95 = vld [vmem:[#allocation2 + $0x68] sm:$0xff]
    %v96 = vld [vmem:[#allocation2 + $0x70] sm:$0xff]
    %v97 = vld [vmem:[#allocation2 + $0x78] sm:$0xff]
    %v98 = vld [vmem:[#allocation2 + $0x80] sm:$0xff]
    %v99 = vld [vmem:[#allocation2 + $0x88] sm:$0xff]
    %v100 = vld [vmem:[#allocation2 + $0x90] sm:$0xff]
    %v101 = vld [vmem:[#allocation2 + $0x98] sm:$0xff]
    %v102 = vld [vmem:[#allocation2 + $0xa0] sm:$0xff]
    %v103 = vld [vmem:[#allocation2 + $0xa8] sm:$0xff]
    %v104 = vld [vmem:[#allocation2 + $0xb0] sm:$0xff]
    %v105 = vld [vmem:[#allocation2 + $0xb8] sm:$0xff]
    %v106 = vld [vmem:[#allocation2 + $0xc0] sm:$0xff]
    %v107 = vld [vmem:[#allocation2 + $0xc8] sm:$0xff]
    %v108 = vld [vmem:[#allocation2 + $0xd0] sm:$0xff]
    %v109 = vld [vmem:[#allocation2 + $0xd8] sm:$0xff]
    %v110 = vld [vmem:[#allocation2 + $0xe0] sm:$0xff]
    %v111 = vld [vmem:[#allocation2 + $0xe8] sm:$0xff]
    %v112 = vld [vmem:[#allocation2 + $0xf0] sm:$0xff]
    %v113 = vld [vmem:[#allocation2 + $0xf8] sm:$0xff]
    %v114 = vld [vmem:[#allocation2 + $0x100] sm:$0xff]
    %v115 = vld [vmem:[#allocation2 + $0x108] sm:$0xff]
    %v116 = vld [vmem:[#allocation2 + $0x110] sm:$0xff]
    %v117 = vld [vmem:[#allocation2 + $0x118] sm:$0xff]
    %v118 = vld [vmem:[#allocation2 + $0x120] sm:$0xff]
    %v119 = vld [vmem:[#allocation2 + $0x128] sm:$0xff]
    %v120 = vld [vmem:[#allocation2 + $0x130] sm:$0xff]
    %v121 = vld [vmem:[#allocation2 + $0x138] sm:$0xff]
    %v122 = vld [vmem:[#allocation2 + $0x140] sm:$0xff]
    %v123 = vld [vmem:[#allocation2 + $0x148] sm:$0xff]
    %v124 = vld [vmem:[#allocation2 + $0x150] sm:$0xff]
    %v125 = vld [vmem:[#allocation2 + $0x158] sm:$0xff]
    %v126 = vld [vmem:[#allocation2 + $0x160] sm:$0xff]
    %v127 = vld [vmem:[#allocation2 + $0x168] sm:$0xff]
    %v128 = vld [vmem:[#allocation2 + $0x170] sm:$0xff]
    %v129 = vld [vmem:[#allocation2 + $0x178] sm:$0xff]
    %v130 = vld [vmem:[#allocation2 + $0x180] sm:$0xff]
    %v131 = vld [vmem:[#allocation2 + $0x188] sm:$0xff]
    %v132 = vld [vmem:[#allocation2 + $0x190] sm:$0xff]
    %v133 = vld [vmem:[#allocation2 + $0x198] sm:$0xff]
    %v134 = vld [vmem:[#allocation2 + $0x1a0] sm:$0xff]
    %v135 = vld [vmem:[#allocation2 + $0x1a8] sm:$0xff]
    %v136 = vld [vmem:[#allocation2 + $0x1b0] sm:$0xff]
    %v137 = vld [vmem:[#allocation2 + $0x1b8] sm:$0xff]
    %v138 = vld [vmem:[#allocation2 + $0x1c0] sm:$0xff]
    %v139 = vld [vmem:[#allocation2 + $0x1c8] sm:$0xff]
    %v140 = vld [vmem:[#allocation2 + $0x1d0] sm:$0xff]
    %v141 = vld [vmem:[#allocation2 + $0x1d8] sm:$0xff]
    %v142 = vld [vmem:[#allocation2 + $0x1e0] sm:$0xff]
    %v143 = vld [vmem:[#allocation2 + $0x1e8] sm:$0xff]
    %v144 = vld [vmem:[#allocation2 + $0x1f0] sm:$0xff]
    %v145 = vld [vmem:[#allocation2 + $0x1f8] sm:$0xff]
    %v146 = vld [vmem:[#allocation2 + $0x200] sm:$0xff]
    %v147 = vld [vmem:[#allocation2 + $0x208] sm:$0xff]
    %v148 = vld [vmem:[#allocation2 + $0x210] sm:$0xff]
    %v149 = vld [vmem:[#allocation2 + $0x218] sm:$0xff]
    %v150 = vld [vmem:[#allocation2 + $0x220] sm:$0xff]
    %v151 = vld [vmem:[#allocation2 + $0x228] sm:$0xff]
    %v152 = vld [vmem:[#allocation2 + $0x230] sm:$0xff]
    %v153 = vld [vmem:[#allocation2 + $0x238] sm:$0xff]
    %v154 = vld [vmem:[#allocation2 + $0x240] sm:$0xff]
    %v155 = vld [vmem:[#allocation2 + $0x248] sm:$0xff]
    %v156 = vld [vmem:[#allocation2 + $0x250] sm:$0xff]
    %v157 = vld [vmem:[#allocation2 + $0x258] sm:$0xff]
    %v158 = vld [vmem:[#allocation2 + $0x260] sm:$0xff]
    %v159 = vld [vmem:[#allocation2 + $0x268] sm:$0xff]
    %v160 = vld [vmem:[#allocation2 + $0x270] sm:$0xff]
    %v161 = vld [vmem:[#allocation2 + $0x278] sm:$0xff]
    %v162 = vld [vmem:[#allocation2 + $0x280] sm:$0xff]
    %v163 = vld [vmem:[#allocation2 + $0x288] sm:$0xff]
    %v164 = vld [vmem:[#allocation2 + $0x290] sm:$0xff]
    %v165 = vld [vmem:[#allocation2 + $0x298] sm:$0xff]
    %v166 = vld [vmem:[#allocation2 + $0x2a0] sm:$0xff]
    %v167 = vld [vmem:[#allocation2 + $0x2a8] sm:$0xff]
    %v168 = vld [vmem:[#allocation2 + $0x2b0] sm:$0xff]
    %v169 = vld [vmem:[#allocation2 + $0x2b8] sm:$0xff]
    %v170 = vld [vmem:[#allocation2 + $0x2c0] sm:$0xff]
    %v171 = vld [vmem:[#allocation2 + $0x2c8] sm:$0xff]
    %v172 = vld [vmem:[#allocation2 + $0x2d0] sm:$0xff]
    %v173 = vld [vmem:[#allocation2 + $0x2d8] sm:$0xff]
    %v174 = vld [vmem:[#allocation2 + $0x2e0] sm:$0xff]
    %v175 = vld [vmem:[#allocation2 + $0x2e8] sm:$0xff]
    %v176 = vld [vmem:[#allocation2 + $0x2f0] sm:$0xff]
    %v177 = vld [vmem:[#allocation2 + $0x2f8] sm:$0xff]
    %v178 = vld [vmem:[#allocation2 + $0x300] sm:$0xff]
    %v179 = vld [vmem:[#allocation2 + $0x308] sm:$0xff]
    %v180 = vld [vmem:[#allocation2 + $0x310] sm:$0xff]
    %v181 = vld [vmem:[#allocation2 + $0x318] sm:$0xff]
    %v182 = vld [vmem:[#allocation2 + $0x320] sm:$0xff]
    %v183 = vld [vmem:[#allocation2 + $0x328] sm:$0xff]
    %v184 = vld [vmem:[#allocation2 + $0x330] sm:$0xff]
    %v185 = vld [vmem:[#allocation2 + $0x338] sm:$0xff]
    %v186 = vld [vmem:[#allocation2 + $0x340] sm:$0xff]
    %v187 = vld [vmem:[#allocation2 + $0x348] sm:$0xff]
    %v188 = vld [vmem:[#allocation2 + $0x350] sm:$0xff]
    %v189 = vld [vmem:[#allocation2 + $0x358] sm:$0xff]
    %v190 = vld [vmem:[#allocation2 + $0x360] sm:$0xff]
    %v191 = vld [vmem:[#allocation2 + $0x368] sm:$0xff]
    %v192 = vld [vmem:[#allocation2 + $0x370] sm:$0xff]
    %v193 = vld [vmem:[#allocation2 + $0x378] sm:$0xff]
    %v194 = vld [vmem:[#allocation2 + $0x380] sm:$0xff]
    %v195 = vld [vmem:[#allocation2 + $0x388] sm:$0xff]
    %v196 = vld [vmem:[#allocation2 + $0x390] sm:$0xff]
    %v197 = vld [vmem:[#allocation2 + $0x398] sm:$0xff]
    %v198 = vld [vmem:[#allocation2 + $0x3a0] sm:$0xff]
    %v199 = vld [vmem:[#allocation2 + $0x3a8] sm:$0xff]
    %v200 = vld [vmem:[#allocation2 + $0x3b0] sm:$0xff]
    %v201 = vld [vmem:[#allocation2 + $0x3b8] sm:$0xff]
    %v202 = vld [vmem:[#allocation2 + $0x3c0] sm:$0xff]
    %v203 = vld [vmem:[#allocation2 + $0x3c8] sm:$0xff]
    %v204 = vld [vmem:[#allocation2 + $0x3d0] sm:$0xff]
    %v205 = vld [vmem:[#allocation2 + $0x3d8] sm:$0xff]
    %v206 = vld [vmem:[#allocation2 + $0x3e0] sm:$0xff]
    %v207 = vld [vmem:[#allocation2 + $0x3e8] sm:$0xff]
    %v208 = vld [vmem:[#allocation2 + $0x3f0] sm:$0xff]
    %v209 = vld [vmem:[#allocation2 + $0x3f8] sm:$0xff]
    %210 = vmatprep.subr.mxu0 %v83
    %211 = vmatpush1.msra.mxu0 %v82
    %212 = vmatprep.subr.mxu0 %v87
    %213 = vmatpush1.msra.mxu0 %v86
    %214 = vmatprep.subr.mxu0 %v91
    %215 = vmatpush1.msra.mxu0 %v90
    %216 = vmatprep.subr.mxu0 %v95
    %217 = vmatpush1.msra.mxu0 %v94
    %218 = vmatprep.subr.mxu0 %v99
    %219 = vmatpush1.msra.mxu0 %v98
    %220 = vmatprep.subr.mxu0 %v103
    %221 = vmatpush1.msra.mxu0 %v102
    %222 = vmatprep.subr.mxu0 %v107
    %223 = vmatpush1.msra.mxu0 %v106
    %224 = vmatprep.subr.mxu0 %v111
    %225 = vmatpush1.msra.mxu0 %v110
    %226 = vmatprep.subr.mxu0 %v115
    %227 = vmatpush1.msra.mxu0 %v114
    %228 = vmatprep.subr.mxu0 %v119
    %229 = vmatpush1.msra.mxu0 %v118
    %230 = vmatprep.subr.mxu0 %v123
    %231 = vmatpush1.msra.mxu0 %v122
    %232 = vmatprep.subr.mxu0 %v127
    %233 = vmatpush1.msra.mxu0 %v126
    %234 = vmatprep.subr.mxu0 %v131
    %235 = vmatpush1.msra.mxu0 %v130
    %236 = vmatprep.subr.mxu0 %v135
    %237 = vmatpush1.msra.mxu0 %v134
    %238 = vmatprep.subr.mxu0 %v139
    %239 = vmatpush1.msra.mxu0 %v138
    %240 = vmatprep.subr.mxu0 %v143
    %241 = vmatpush1.msra.mxu0 %v142
    %242 = vmatprep.subr.mxu0 %v147
    %243 = vmatpush1.msra.mxu0 %v146
    %244 = vmatprep.subr.mxu0 %v151
    %245 = vmatpush1.msra.mxu0 %v150
    %246 = vmatprep.subr.mxu0 %v155
    %247 = vmatpush1.msra.mxu0 %v154
    %248 = vmatprep.subr.mxu0 %v159
    %249 = vmatpush1.msra.mxu0 %v158
    %250 = vmatprep.subr.mxu0 %v163
    %251 = vmatpush1.msra.mxu0 %v162
    %252 = vmatprep.subr.mxu0 %v167
    %253 = vmatpush1.msra.mxu0 %v166
    %254 = vmatprep.subr.mxu0 %v171
    %255 = vmatpush1.msra.mxu0 %v170
    %256 = vmatprep.subr.mxu0 %v175
    %257 = vmatpush1.msra.mxu0 %v174
    %258 = vmatprep.subr.mxu0 %v179
    %259 = vmatpush1.msra.mxu0 %v178
    %260 = vmatprep.subr.mxu0 %v183
    %261 = vmatpush1.msra.mxu0 %v182
    %262 = vmatprep.subr.mxu0 %v187
    %263 = vmatpush1.msra.mxu0 %v186
    %264 = vmatprep.subr.mxu0 %v191
    %265 = vmatpush1.msra.mxu0 %v190
    %266 = vmatprep.subr.mxu0 %v195
    %267 = vmatpush1.msra.mxu0 %v194
    %268 = vmatprep.subr.mxu0 %v199
    %269 = vmatpush1.msra.mxu0 %v198
    %270 = vmatprep.subr.mxu0 %v203
    %271 = vmatpush1.msra.mxu0 %v202
    %272 = vmatprep.subr.mxu0 %v207
    %273 = vmatpush1.msra.mxu0 %v206
    %274 = vmatprep.mubr.f32.mxu0 %v81
    %275 = vmatmul.mubr.f32.gmra.mrb[0].mxu0 %v80
    %v276 = vpop.f32.mrb[0].mxu0
    %v277 = vadd.f32 0.0, %v276
    %v278 = vpop.f32.mrb[0].mxu0
    %v279 = vadd.f32 0.0, %v278
    %280 = vdwg.mxu0
    %281 = vmatprep.subr.mxu0 %v85
    %282 = vmatpush1.msra.mxu0 %v84
    %283 = vmatprep.subr.mxu0 %v89
    %284 = vmatpush1.msra.mxu0 %v88
    %285 = vmatprep.subr.mxu0 %v93
    %286 = vmatpush1.msra.mxu0 %v92
    %287 = vmatprep.subr.mxu0 %v97
    %288 = vmatpush1.msra.mxu0 %v96
    %289 = vmatprep.subr.mxu0 %v101
    %290 = vmatpush1.msra.mxu0 %v100
    %291 = vmatprep.subr.mxu0 %v105
    %292 = vmatpush1.msra.mxu0 %v104
    %293 = vmatprep.subr.mxu0 %v109
    %294 = vmatpush1.msra.mxu0 %v108
    %295 = vmatprep.subr.mxu0 %v113
    %296 = vmatpush1.msra.mxu0 %v112
    %297 = vmatprep.subr.mxu0 %v117
    %298 = vmatpush1.msra.mxu0 %v116
    %299 = vmatprep.subr.mxu0 %v121
    %300 = vmatpush1.msra.mxu0 %v120
    %301 = vmatprep.subr.mxu0 %v125
    %302 = vmatpush1.msra.mxu0 %v124
    %303 = vmatprep.subr.mxu0 %v129
    %304 = vmatpush1.msra.mxu0 %v128
    %305 = vmatprep.subr.mxu0 %v133
    %306 = vmatpush1.msra.mxu0 %v132
    %307 = vmatprep.subr.mxu0 %v137
    %308 = vmatpush1.msra.mxu0 %v136
    %309 = vmatprep.subr.mxu0 %v141
    %310 = vmatpush1.msra.mxu0 %v140
    %311 = vmatprep.subr.mxu0 %v145
    %312 = vmatpush1.msra.mxu0 %v144
    %313 = vmatprep.subr.mxu0 %v149
    %314 = vmatpush1.msra.mxu0 %v148
    %315 = vmatprep.subr.mxu0 %v153
    %316 = vmatpush1.msra.mxu0 %v152
    %317 = vmatprep.subr.mxu0 %v157
    %318 = vmatpush1.msra.mxu0 %v156
    %319 = vmatprep.subr.mxu0 %v161
    %320 = vmatpush1.msra.mxu0 %v160
    %321 = vmatprep.subr.mxu0 %v165
    %322 = vmatpush1.msra.mxu0 %v164
    %323 = vmatprep.subr.mxu0 %v169
    %324 = vmatpush1.msra.mxu0 %v168
    %325 = vmatprep.subr.mxu0 %v173
    %326 = vmatpush1.msra.mxu0 %v172
    %327 = vmatprep.subr.mxu0 %v177
    %328 = vmatpush1.msra.mxu0 %v176
    %329 = vmatprep.subr.mxu0 %v181
    %330 = vmatpush1.msra.mxu0 %v180
    %331 = vmatprep.subr.mxu0 %v185
    %332 = vmatpush1.msra.mxu0 %v184
    %333 = vmatprep.subr.mxu0 %v189
    %334 = vmatpush1.msra.mxu0 %v188
    %335 = vmatprep.subr.mxu0 %v193
    %336 = vmatpush1.msra.mxu0 %v192
    %337 = vmatprep.subr.mxu0 %v197
    %338 = vmatpush1.msra.mxu0 %v196
    %339 = vmatprep.subr.mxu0 %v201
    %340 = vmatpush1.msra.mxu0 %v200
    %341 = vmatprep.subr.mxu0 %v205
    %342 = vmatpush1.msra.mxu0 %v204
    %343 = vmatprep.subr.mxu0 %v209
    %344 = vmatpush1.msra.mxu0 %v208
    %345 = vmatprep.mubr.f32.mxu0 %v81
    %346 = vmatmul.mubr.f32.gmra.mrb[0].mxu0 %v80
    %v347 = vpop.f32.mrb[0].mxu0
    %v348 = vadd.f32 0.0, %v347
    %v349 = vpop.f32.mrb[0].mxu0
    %v350 = vadd.f32 0.0, %v349
    %351 = vdwg.mxu0
    %v352 = vld [vmem:[%s3] sm:$0xff]
    %v353 = vld [vmem:[%s3 + $0x8] sm:$0xff]
    %v354 = vld [vmem:[%s3 + $0x10] sm:$0xff]
    %v355 = vld [vmem:[%s3 + $0x18] sm:$0xff]
    %v356 = vand.u32 2147483647, %v277
    %v357 = vand.u32 2147483647, %v279
    %v358 = vand.u32 2147483647, %v348
    %v359 = vand.u32 2147483647, %v350
    %v360 = vadd.f32 %v352, %v356
    %v361 = vadd.f32 %v353, %v357
    %v362 = vadd.f32 %v354, %v358
    %v363 = vadd.f32 %v355, %v359
    %364 = vst [vmem:[%s3] sm:$0xff] %v360
    %365 = vst [vmem:[%s3 + $0x8] sm:$0xff] %v361
    %366 = vst [vmem:[%s3 + $0x10] sm:$0xff] %v362
    %367 = vst [vmem:[%s3 + $0x18] sm:$0xff] %v363
    // Predicated region
    $region22: #{fft_loss.1} parent=1 // pred_check
      _
    $region23: #{fft_loss.1} parent=1 // pred_check_branch
      %369 = sbr.rel (0) target = $region25
    $region24: #{fft_loss.1} parent=1 // pred_region
      _
    $region25: #{fft_loss.1} parent=1 // pred_fallthru
      _
    // Predicated region
    $region26: #{fft_loss.1} parent=1 // pred_check
      _
    $region27: #{fft_loss.1} parent=1 // pred_check_branch
      %371 = sbr.rel (0) target = $region29
    $region28: #{fft_loss.1} parent=1 // pred_region
      _
    $region29: #{fft_loss.1} parent=1 // pred_fallthru
      _
    %372 = vsyncpa [#allocation3], 1

</llo_original>
